<compile_context>
chip_gen: v6e
topology: v6e:2x2x1
jax: 0.10.0
libtpu: 0.0.40
codegen_flags: <defaults>
</compile_context>

<pallas_src>
import functools

import jax
import jax.numpy as jnp
import numpy as np
from jax import lax
from jax.experimental import pallas as pl
from jax.experimental.pallas import tpu as pltpu


def _round_up(x, m):
    return (x + m - 1) // m * m


# ----------------------- Pallas kernels -----------------------
def _score_replicate_kernel(lhs_ref, rhs_ref, out_ref, *, e_pad, pre_len):
    # Single-step path: one fused K=2D matmul, then write the pre_len replicas
    # directly (fuses torch .repeat into lane-aligned stores; e_pad % 128 == 0).
    # lhs_ref: (B_pad, 2D) bf16, rhs_ref: (E_pad, 2D) bf16, out_ref: (B_pad, pre_len*E_pad)
    score = (0.5 * lax.dot_general(
        lhs_ref[...], rhs_ref[...],
        dimension_numbers=(((1,), (1,)), ((), ())),
        preferred_element_type=jnp.float32)).astype(out_ref.dtype)
    for p in range(pre_len):                         # static unroll, aligned offsets
        out_ref[:, pl.ds(p * e_pad, e_pad)] = score


def _score_tiled_kernel(lhs_ref, rhs_ref, out_ref):
    # Tiled path: recompute the tiny dot every step (cheaper than an acc->out copy),
    # so there is no cross-step dependency and both grid axes may be "parallel".
    # lhs_ref: (B_pad, 2D) bf16 (resident), rhs_ref: (E_TILE, 2D) bf16 (pipelined),
    # out_ref: (B_pad, E_TILE) one tile of the pre_len-replicated pred_hard.
    out_ref[...] = (0.5 * lax.dot_general(
        lhs_ref[...], rhs_ref[...],
        dimension_numbers=(((1,), (1,)), ((), ())),
        preferred_element_type=jnp.float32)).astype(out_ref.dtype)


def sim_score_pallas(lhs_bf16, rhs_bf16, pre_len, e_tile, out_dtype=jnp.float32):
    """lhs_bf16: (B_pad, 2D) bf16, rhs_bf16: (E_pad, 2D) bf16.
    Returns (B_pad, pre_len * E_pad) = tile(sim, (1, pre_len)) on padded shapes."""
    b_pad, k = lhs_bf16.shape
    e_pad, k2 = rhs_bf16.shape
    assert k == k2 and e_pad % e_tile == 0
    n_e = e_pad // e_tile

    out_bytes = b_pad * pre_len * e_pad * jnp.dtype(out_dtype).itemsize
    rhs_bytes = rhs_bf16.size * rhs_bf16.dtype.itemsize
    # Small problem: collapse to one grid step (per-step overhead dominates here).
    if out_bytes + rhs_bytes <= (2 << 20):
        kern = functools.partial(_score_replicate_kernel, e_pad=e_pad, pre_len=pre_len)
        return pl.pallas_call(
            kern,
            out_shape=jax.ShapeDtypeStruct((b_pad, pre_len * e_pad), out_dtype),
            grid=(1,),
            in_specs=[pl.BlockSpec((b_pad, k), lambda i: (0, 0)),
                      pl.BlockSpec((e_pad, k), lambda i: (0, 0))],
            out_specs=pl.BlockSpec((b_pad, pre_len * e_pad), lambda i: (0, 0)),
            compiler_params=pltpu.CompilerParams(
                dimension_semantics=("arbitrary",)),
        )(lhs_bf16, rhs_bf16)

    # Large problem: tile over E (lane-dense output tiles, pipelined RHS DMA).
    # pre_len innermost so each RHS tile is fetched once; both axes parallel (v7x).
    return pl.pallas_call(
        _score_tiled_kernel,
        out_shape=jax.ShapeDtypeStruct((b_pad, pre_len * e_pad), out_dtype),
        grid=(n_e, pre_len),
        in_specs=[pl.BlockSpec((b_pad, k), lambda j, p: (0, 0)),     # resident LHS
                  pl.BlockSpec((e_tile, k), lambda j, p: (j, 0))],   # E-tiled RHS
        out_specs=pl.BlockSpec((b_pad, e_tile), lambda j, p: (0, p * n_e + j)),
        compiler_params=pltpu.CompilerParams(
            dimension_semantics=("parallel", "parallel")),
    )(lhs_bf16, rhs_bf16)


# ----------------------- Model wrapper (forward) -----------------------
class CEGoalForward:
    """JAX/Pallas re-implementation of RNN.forward (CE_Goal)."""

    def __init__(self, key, *, batch_size, num_edges, edge_dim, direction_dim,
                 direction, pre_len, out_dtype=jnp.float32):
        assert edge_dim == direction_dim, "broadcast add requires equal dims"
        self.batch_size = batch_size
        self.num_edges = num_edges
        self.edge_dim = edge_dim
        self.direction = direction
        self.pre_len = pre_len
        # bf16 here halves output HBM bytes (biggest win on v5e) if downstream allows.
        self.out_dtype = out_dtype

        k = jax.random.split(key, 5)
        stdv = 0.1

        # nn.Embedding(n, d, padding_idx=0)
        def emb(k_, n, d):
            w = jax.random.uniform(k_, (n, d), jnp.float32, -stdv, stdv)
            return w.at[0].set(0.0)

        self.link_h_w = emb(k[0], num_edges + 1, edge_dim)
        self.link_t_w = emb(k[1], num_edges + 1, edge_dim)
        self.direction_w = emb(k[2], direction + 1, direction_dim)
        # Initialized but unused in forward -- faithful to the original PyTorch module.
        self.direction_inv_w = emb(k[3], direction + 1, direction_dim)
        # loc_dlabels_matrix: (num_edges, num_edges) direction labels in [0, direction-1]
        self.loc_dlabels_matrix = jax.random.randint(
            k[4], (num_edges, num_edges), 0, direction, dtype=jnp.int32)

        # ---- static tiling: pad E up to a multiple of the chosen tile so we never
        #      silently fall back to narrow 128-wide tiles ----
        self.e_tile = min(512, _round_up(num_edges, 128))
        self.num_edges_pad = _round_up(num_edges, self.e_tile)
        self.batch_pad = _round_up(batch_size, 8)

        # ---- static kernel-side RHS table, built ONCE (no per-call [1:, :] copies) ----
        rhs = jnp.concatenate([self.link_t_w[1:], self.link_h_w[1:]], axis=1)  # (E, 2D)
        rhs = jnp.pad(rhs, ((0, self.num_edges_pad - num_edges), (0, 0)))
        self.rhs_bf16 = rhs.astype(jnp.bfloat16)                               # (E_pad, 2D)

        # One jit over the whole forward: gathers + concat + pad + cast + pallas_call
        # + depad fuse into a single launch (this path is latency/overhead-bound).
        self._jit_forward = jax.jit(self._forward_impl)

    def _forward_impl(self, inputs, goal, rand_key):
        B, E = self.batch_size, self.num_edges
        last_obs = inputs[:, -1]                                              # (B,)
        goal_directions = self.loc_dlabels_matrix[last_obs - 1, goal] + 1     # 1..direction
        # NOTE: "+ 4" kept verbatim from the PyTorch spec (hardcoded direction//2 for direction==8).
        goal_directions_inv = goal_directions + 4
        goal_directions_inv = jnp.where(
            goal_directions_inv > self.direction,
            goal_directions_inv - self.direction,
            goal_directions_inv)

        heads = last_obs
        link_hh_embs = self.link_h_w[heads]                          # (B, D)
        link_th_embs = self.link_t_w[heads]                          # (B, D)
        direction_embs = self.direction_w[goal_directions]           # (B, D)
        # Original PyTorch also gathers this from direction_emblayer (not the _inv table).
        direction_inv_embs = self.direction_w[goal_directions_inv]   # (B, D)

        # Fused LHS = [hh + de | th + dinv]  -> (B_pad, 2D) bf16
        lhs = jnp.concatenate([link_hh_embs + direction_embs,
                               link_th_embs + direction_inv_embs], axis=1)
        lhs = jnp.pad(lhs, ((0, self.batch_pad - B), (0, 0))).astype(jnp.bfloat16)

        # --- Pallas hot path: one K=2D matmul + fused pre_len replication ---
        out = sim_score_pallas(lhs, self.rhs_bf16, self.pre_len, self.e_tile,
                               out_dtype=self.out_dtype)              # (B_pad, pre_len*E_pad)

        # Depad to the exact PyTorch shape.  At production sizes prefer consuming the
        # padded (B_pad, pre_len, E_pad) layout directly to avoid this extra copy.
        pred_hard = (out.reshape(self.batch_pad, self.pre_len, self.num_edges_pad)
                        [:B, :, :E]
                        .reshape(B, self.pre_len * E)
                        .astype(jnp.float32))                         # (B, E*pre_len)

        pred_d_rand = jax.random.uniform(
            rand_key, (B, self.direction * self.pre_len), dtype=jnp.float32)
        loss = jnp.float32(0.0)                                       # faithful: forward returns loss = 0
        direction_correct = jnp.sum(
            (goal_directions == goal_directions).astype(jnp.int32))   # faithful placeholder metric
        return pred_hard, pred_d_rand, loss, direction_correct

    def __call__(self, inputs, directions, mask, goal, y, rand_key):
        # directions / mask / y are unused by the original forward (kept for signature parity).
        return self._jit_forward(inputs, goal, rand_key)


# ----------------------- Reference (pure JAX, f32) -----------------------
def _reference_pred_hard(model, inputs, goal):
    last_obs = inputs[:, -1]
    gd = model.loc_dlabels_matrix[last_obs - 1, goal] + 1
    gdi = gd + 4
    gdi = jnp.where(gdi > model.direction, gdi - model.direction, gdi)
    hh = model.link_h_w[last_obs]
    th = model.link_t_w[last_obs]
    de = model.direction_w[gd]
    dinv = model.direction_w[gdi]
    tt = model.link_t_w[1:]
    ht = model.link_h_w[1:]
    s1 = (hh + de) @ tt.T
    s2 = ht @ (dinv + th).T
    sim = (s1 + s2.T) / 2.0
    return jnp.tile(sim, (1, model.pre_len))


# ----------------------- Demo -----------------------
if __name__ == "__main__":
    B, S, E, D, NDIR, PRE_LEN = 8, 8, 200, 32, 8, 2   # E not a multiple of 128 -> exercises padding

    key = jax.random.PRNGKey(0)
    k_model, k_in, k_goal, k_y, k_rand = jax.random.split(key, 5)

    model = CEGoalForward(k_model, batch_size=B, num_edges=E, edge_dim=D,
                          direction_dim=D, direction=NDIR, pre_len=PRE_LEN)

    inputs = jax.random.randint(k_in, (B, S), 1, E + 1, dtype=jnp.int32)        # 1..E
    directions = jax.random.randint(k_goal, (B, S), 1, NDIR + 1, dtype=jnp.int32)
    mask = jnp.full((B,), S, dtype=jnp.int32)
    goal = jax.random.randint(k_goal, (B,), 0, E, dtype=jnp.int32)              # 0..E-1
    y = jax.random.randint(k_y, (B, PRE_LEN), 0, E, dtype=jnp.int32)

    pred_hard, pred_d_rand, loss, direction_correct = model(
        inputs, directions, mask, goal, y, k_rand)
    jax.block_until_ready((pred_hard, pred_d_rand, loss, direction_correct))

    assert pred_hard.shape == (B, E * PRE_LEN)
    assert pred_d_rand.shape == (B, NDIR * PRE_LEN)
    assert int(direction_correct) == B

    # Correctness vs pure-f32 reference (kernel uses bf16 inputs, f32 accumulation).
    ref = _reference_pred_hard(model, inputs, goal)
    np.testing.assert_allclose(np.asarray(pred_hard), np.asarray(ref),
                               rtol=5e-2, atol=5e-3)

    print("KERNEL_OK")
</pallas_src>

<mosaic_0001>
module attributes {stable_mosaic.version = 11 : i64} {
  func.func @_score_replicate_kernel(%arg0: i32, %arg1: memref<8x64xbf16, #tpu.memory_space<vmem>>, %arg2: memref<256x64xbf16, #tpu.memory_space<vmem>>, %arg3: memref<8x512xf32, #tpu.memory_space<vmem>>) attributes {dimension_semantics = [#tpu.dimension_semantics<arbitrary>], iteration_bounds = array<i64: 1>, scalar_prefetch = 0 : i64, scratch_operands = 0 : i64, tpu.core_type = #tpu.core_type<tc>, window_params = [{pipeline_mode = #tpu.pipeline_mode<synchronous>, transform_indices = @transform_0, window_bounds = array<i64: 8, 64>}, {pipeline_mode = #tpu.pipeline_mode<synchronous>, transform_indices = @transform_1, window_bounds = array<i64: 256, 64>}, {pipeline_mode = #tpu.pipeline_mode<synchronous>, transform_indices = @transform_2, window_bounds = array<i64: 8, 512>}]} {
    %c0 = arith.constant 0 : index
    %c0_0 = arith.constant 0 : index
    %0 = vector.load %arg1[%c0, %c0_0] : memref<8x64xbf16, #tpu.memory_space<vmem>>, vector<8x64xbf16>
    %c0_1 = arith.constant 0 : index
    %c0_2 = arith.constant 0 : index
    %1 = vector.load %arg2[%c0_1, %c0_2] : memref<256x64xbf16, #tpu.memory_space<vmem>>, vector<256x64xbf16>
    %cst = arith.constant dense<0.000000e+00> : vector<8x256xf32>
    %2 = tpu.matmul %0, %1, %cst {dimension_numbers = #tpu.dot_dimension_numbers<[1], [1], [0], [0], [0, 0, 1, 0], [], []>} : vector<8x64xbf16>, vector<256x64xbf16>, vector<8x256xf32> -> vector<8x256xf32>
    %cst_3 = arith.constant 5.000000e-01 : f32
    %3 = vector.broadcast %cst_3 : f32 to vector<8x256xf32>
    %4 = arith.mulf %3, %2 : vector<8x256xf32>
    %c0_4 = arith.constant 0 : index
    %c0_5 = arith.constant 0 : index
    %5 = vector.load %arg3[%c0_4, %c0_5] : memref<8x512xf32, #tpu.memory_space<vmem>>, vector<8x256xf32>
    tpu.vector_store %arg3[%c0_4, %c0_5], %4 {strides = array<i32>} : memref<8x512xf32, #tpu.memory_space<vmem>>, vector<8x256xf32>,
    %c0_6 = arith.constant 0 : index
    %c256 = arith.constant 256 : index
    %6 = vector.load %arg3[%c0_6, %c256] : memref<8x512xf32, #tpu.memory_space<vmem>>, vector<8x256xf32>
    tpu.vector_store %arg3[%c0_6, %c256], %4 {strides = array<i32>} : memref<8x512xf32, #tpu.memory_space<vmem>>, vector<8x256xf32>,
    return
  }
  func.func @transform_0(%arg0: i32) -> (i32, i32) {
    %c0_i32 = arith.constant 0 : i32
    %c0_i32_0 = arith.constant 0 : i32
    %c0_i32_1 = arith.constant 0 : i32
    return %c0_i32, %c0_i32_0 : i32, i32
  }
  func.func @transform_1(%arg0: i32) -> (i32, i32) {
    %c0_i32 = arith.constant 0 : i32
    %c0_i32_0 = arith.constant 0 : i32
    %c0_i32_1 = arith.constant 0 : i32
    return %c0_i32, %c0_i32_0 : i32, i32
  }
  func.func @transform_2(%arg0: i32) -> (i32, i32) {
    %c0_i32 = arith.constant 0 : i32
    %c0_i32_0 = arith.constant 0 : i32
    %c0_i32_1 = arith.constant 0 : i32
    return %c0_i32, %c0_i32_0 : i32, i32
  }
}

</mosaic_0001>

<llo_original>
// kernel: _forward_impl.1
$region0: #{_forward_impl.1}
  #allocation0 [shape = 'u32[]', space=smem, size = 0x4, offset = 0x4, fixed_abs, tag = 'smem constant byte address 0x4 - core index']
  #allocation1 [shape = 'u32[144,128]{1,0:T(1,128)}', space=vmem, size = 0x12000, scoped, tag = 'internal scratch']
  %s0 = inlined_call_operand.vmem [shape: bf16[8,64], index: 0, kind: input, shape index: {}]
  %s1 = inlined_call_operand.vmem [shape: bf16[256,64], index: 1, kind: input, shape index: {}]
  %s2 = inlined_call_operand.vmem [shape: f32[8,512], index: 2, kind: output, shape index: {}]
  %s3 = sld [smem:[#allocation0]]
  $region18: #{_forward_impl.1} parent=0
    _
  %s5 = ssub.s32 1, %s3
  %s6 = scalar_select 0, %s5, %s3
  // Predicated region
  $region2: #{_forward_impl.1} parent=0 // pred_check
    _
  $region3: #{_forward_impl.1} parent=0 // pred_check_branch
    %8 = sbr.rel (0) target = $region5
  $region4: #{_forward_impl.1} parent=0 // pred_region
    _
  $region5: #{_forward_impl.1} parent=0 // pred_fallthru
    _
  // Predicated region
  $region6: #{_forward_impl.1} parent=0 // pred_check
    _
  $region7: #{_forward_impl.1} parent=0 // pred_check_branch
    %10 = sbr.rel (0) target = $region9
  $region8: #{_forward_impl.1} parent=0 // pred_region
    _
  $region9: #{_forward_impl.1} parent=0 // pred_fallthru
    _
  %v12 = vld [vmem:[%s0] sm:$0xf]
  %v13 = vld [vmem:[%s1] sm:$0xf]
  %v14 = vld [vmem:[%s1 + $0x4] sm:$0xf]
  %v15 = vld [vmem:[%s1 + $0x8] sm:$0xf]
  %v16 = vld [vmem:[%s1 + $0xc] sm:$0xf]
  %v17 = vld [vmem:[%s1 + $0x10] sm:$0xf]
  %v18 = vld [vmem:[%s1 + $0x14] sm:$0xf]
  %v19 = vld [vmem:[%s1 + $0x18] sm:$0xf]
  %v20 = vld [vmem:[%s1 + $0x1c] sm:$0xf]
  %v21 = vld [vmem:[%s1 + $0x20] sm:$0xf]
  %v22 = vld [vmem:[%s1 + $0x24] sm:$0xf]
  %v23 = vld [vmem:[%s1 + $0x28] sm:$0xf]
  %v24 = vld [vmem:[%s1 + $0x2c] sm:$0xf]
  %v25 = vld [vmem:[%s1 + $0x30] sm:$0xf]
  %v26 = vld [vmem:[%s1 + $0x34] sm:$0xf]
  %v27 = vld [vmem:[%s1 + $0x38] sm:$0xf]
  %v28 = vld [vmem:[%s1 + $0x3c] sm:$0xf]
  %v29 = vld [vmem:[%s1 + $0x40] sm:$0xf]
  %v30 = vld [vmem:[%s1 + $0x44] sm:$0xf]
  %v31 = vld [vmem:[%s1 + $0x48] sm:$0xf]
  %v32 = vld [vmem:[%s1 + $0x4c] sm:$0xf]
  %v33 = vld [vmem:[%s1 + $0x50] sm:$0xf]
  %v34 = vld [vmem:[%s1 + $0x54] sm:$0xf]
  %v35 = vld [vmem:[%s1 + $0x58] sm:$0xf]
  %v36 = vld [vmem:[%s1 + $0x5c] sm:$0xf]
  %v37 = vld [vmem:[%s1 + $0x60] sm:$0xf]
  %v38 = vld [vmem:[%s1 + $0x64] sm:$0xf]
  %v39 = vld [vmem:[%s1 + $0x68] sm:$0xf]
  %v40 = vld [vmem:[%s1 + $0x6c] sm:$0xf]
  %v41 = vld [vmem:[%s1 + $0x70] sm:$0xf]
  %v42 = vld [vmem:[%s1 + $0x74] sm:$0xf]
  %v43 = vld [vmem:[%s1 + $0x78] sm:$0xf]
  %v44 = vld [vmem:[%s1 + $0x7c] sm:$0xf]
  %v77 = vunpack.c.l.b16 %v13
  %v78 = vunpack.c.l.b16 %v14
  %v79 = vunpack.c.l.b16 %v15
  %v80 = vunpack.c.l.b16 %v16
  %v81 = vunpack.c.l.b16 %v17
  %v82 = vunpack.c.l.b16 %v18
  %v83 = vunpack.c.l.b16 %v19
  %v84 = vunpack.c.l.b16 %v20
  %v85 = vunpack.c.l.b16 %v21
  %v86 = vunpack.c.l.b16 %v22
  %v87 = vunpack.c.l.b16 %v23
  %v88 = vunpack.c.l.b16 %v24
  %v89 = vunpack.c.l.b16 %v25
  %v90 = vunpack.c.l.b16 %v26
  %v91 = vunpack.c.l.b16 %v27
  %v92 = vunpack.c.l.b16 %v28
  %v93 = vunpack.c.l.b16 %v29
  %v94 = vunpack.c.l.b16 %v30
  %v95 = vunpack.c.l.b16 %v31
  %v96 = vunpack.c.l.b16 %v32
  %v97 = vunpack.c.l.b16 %v33
  %v98 = vunpack.c.l.b16 %v34
  %v99 = vunpack.c.l.b16 %v35
  %v100 = vunpack.c.l.b16 %v36
  %v101 = vunpack.c.l.b16 %v37
  %v102 = vunpack.c.l.b16 %v38
  %v103 = vunpack.c.l.b16 %v39
  %v104 = vunpack.c.l.b16 %v40
  %v105 = vunpack.c.l.b16 %v41
  %v106 = vunpack.c.l.b16 %v42
  %v107 = vunpack.c.l.b16 %v43
  %v108 = vunpack.c.l.b16 %v44
  %v109 = vpack.c.b16 %v78, %v77
  %v110 = vpack.c.b16 %v80, %v79
  %v111 = vpack.c.b16 %v82, %v81
  %v112 = vpack.c.b16 %v84, %v83
  %v113 = vpack.c.b16 %v86, %v85
  %v114 = vpack.c.b16 %v88, %v87
  %v115 = vpack.c.b16 %v90, %v89
  %v116 = vpack.c.b16 %v92, %v91
  %v117 = vpack.c.b16 %v94, %v93
  %v118 = vpack.c.b16 %v96, %v95
  %v119 = vpack.c.b16 %v98, %v97
  %v120 = vpack.c.b16 %v100, %v99
  %v121 = vpack.c.b16 %v102, %v101
  %v122 = vpack.c.b16 %v104, %v103
  %v123 = vpack.c.b16 %v106, %v105
  %v124 = vpack.c.b16 %v108, %v107
  %vm125 = vcmask 523264
  %v127 = vsel %vm125, %v12, 0
  %v130 = vsel %vm125, %v109, 0
  %v133 = vsel %vm125, %v110, 0
  %v136 = vsel %vm125, %v111, 0
  %v139 = vsel %vm125, %v112, 0
  %v142 = vsel %vm125, %v113, 0
  %v145 = vsel %vm125, %v114, 0
  %v148 = vsel %vm125, %v115, 0
  %v151 = vsel %vm125, %v116, 0
  %v154 = vsel %vm125, %v117, 0
  %v157 = vsel %vm125, %v118, 0
  %v160 = vsel %vm125, %v119, 0
  %v163 = vsel %vm125, %v120, 0
  %v166 = vsel %vm125, %v121, 0
  %v169 = vsel %vm125, %v122, 0
  %v172 = vsel %vm125, %v123, 0
  %v175 = vsel %vm125, %v124, 0
  %177 = vmatprep.subr.bf16.mxu0 0
  %178 = vmatpush1.bf16.xpose.msra.mxu0 %v151
  %179 = vmatprep.subr.bf16.mxu0 0
  %180 = vmatpush1.bf16.xpose.msra.mxu0 %v148
  %181 = vmatprep.subr.bf16.mxu0 0
  %182 = vmatpush1.bf16.xpose.msra.mxu0 %v145
  %183 = vmatprep.subr.bf16.mxu0 0
  %184 = vmatpush1.bf16.xpose.msra.mxu0 %v142
  %185 = vmatprep.subr.bf16.mxu0 0
  %186 = vmatpush1.bf16.xpose.msra.mxu0 %v139
  %187 = vmatprep.subr.bf16.mxu0 0
  %188 = vmatpush1.bf16.xpose.msra.mxu0 %v136
  %189 = vmatprep.subr.bf16.mxu0 0
  %190 = vmatpush1.bf16.xpose.msra.mxu0 %v133
  %191 = vmatprep.subr.bf16.mxu0 0
  %192 = vmatpush1.bf16.xpose.msra.mxu0 %v130
  %193 = vmatprep.subr.bf16.mxu0 0
  %194 = vmatpush2.bf16.xpose.msra.mxu0 %v175
  %195 = vmatprep.subr.bf16.mxu0 0
  %196 = vmatpush2.bf16.xpose.msra.mxu0 %v172
  %197 = vmatprep.subr.bf16.mxu0 0
  %198 = vmatpush2.bf16.xpose.msra.mxu0 %v169
  %199 = vmatprep.subr.bf16.mxu0 0
  %200 = vmatpush2.bf16.xpose.msra.mxu0 %v166
  %201 = vmatprep.subr.bf16.mxu0 0
  %202 = vmatpush2.bf16.xpose.msra.mxu0 %v163
  %203 = vmatprep.subr.bf16.mxu0 0
  %204 = vmatpush2.bf16.xpose.msra.mxu0 %v160
  %205 = vmatprep.subr.bf16.mxu0 0
  %206 = vmatpush2.bf16.xpose.msra.mxu0 %v157
  %207 = vmatprep.subr.bf16.mxu0 0
  %208 = vmatpush2.bf16.xpose.msra.mxu0 %v154
  %209 = vmatprep.mubr.bf16.mxu0 0
  %210 = vmatmul.mubr.bf16.gmra.mxu0 %v127
  %v211 = vpop.f32.mrf.mxu0
  %v212 = vadd.f32 0.0, %v211
  %v213 = vpop.f32.mrf.mxu0
  %v214 = vadd.f32 0.0, %v213
  %v215 = vpop.f32.mrf.mxu0
  %v216 = vpop.f32.mrf.mxu0
  %217 = vdwg.mxu0
  %v218 = vmul.f32 %v212, 0.5
  %v219 = vmul.f32 %v214, 0.5
  %220 = vst [vmem:[%s2] sm:$0xff] %v218
  %221 = vst [vmem:[%s2 + $0x8] sm:$0xff] %v219
  %222 = vst [vmem:[%s2 + $0x10] sm:$0xff] %v218
  %223 = vst [vmem:[%s2 + $0x18] sm:$0xff] %v219
  // Predicated region
  $region10: #{_forward_impl.1} parent=0 // pred_check
    _
  $region11: #{_forward_impl.1} parent=0 // pred_check_branch
    %225 = sbr.rel (0) target = $region13
  $region12: #{_forward_impl.1} parent=0 // pred_region
    _
  $region13: #{_forward_impl.1} parent=0 // pred_fallthru
    _
  // Predicated region
  $region14: #{_forward_impl.1} parent=0 // pred_check
    _
  $region15: #{_forward_impl.1} parent=0 // pred_check_branch
    %227 = sbr.rel (0) target = $region17
  $region16: #{_forward_impl.1} parent=0 // pred_region
    _
  $region17: #{_forward_impl.1} parent=0 // pred_fallthru
    _

</llo_original>
